<compile_context>
chip_gen: v6e
topology: v6e:2x2x1
jax: 0.10.0
libtpu: 0.0.40
codegen_flags: <defaults>
</compile_context>

<pallas_src>
import numpy as np
import jax
import jax.numpy as jnp
from jax.experimental import pallas as pl
from jax.experimental.pallas import tpu as pltpu

# ------------------------- model dimensions (small) -------------------------
B       = 2      # batch
Z_DIM   = 64     # G.z_dim
HID     = 64     # mapping hidden width
W_DIM   = 64     # G.w_dim
NUM_WS  = 16     # G.num_ws (conceptual; replicated ws is never materialized)
C0      = 32     # synthesis base channels
H = W   = 16     # output resolution
HW      = H * W
OUT_C   = 3      # RGB (only channel 0 survives the final index_select)

_GAIN      = float(np.sqrt(2.0))   # lrelu gain
_NEG_SLOPE = 0.2 * _GAIN           # lrelu negative slope with gain folded in


def _round_up(x, m):
    return ((x + m - 1) // m) * m


# ------------------------- fused Pallas kernel -------------------------
def generator_kernel(z_ref, shift_ref, wstack_ref, vec_ref, syn_w_ref, syn_b_ref, out_ref):
    """Fused mapping (+truncation +W-shift) and constant-folded synthesis (channel 0)."""
    # ---- mapping network ----
    z = z_ref[...]
    # normalize_2nd_moment over the feature axis
    z = z * jax.lax.rsqrt(jnp.mean(z * z, axis=1, keepdims=True) + 1e-8)

    # packed parameter slabs (static, tile-aligned sub-slices)
    w1     = wstack_ref[0:Z_DIM, :]              # [Z_DIM, HID]
    w2h    = wstack_ref[Z_DIM:Z_DIM + HID, :]    # [HID, W_DIM]  (already scaled by psi=0.5)
    b1     = vec_ref[0:1, :]                     # [1, HID]
    b2h    = vec_ref[1:2, :]                     # [1, W_DIM]    (already scaled by psi=0.5)
    wavg_h = vec_ref[2:3, :]                     # [1, W_DIM]    (0.5 * w_avg)

    h = jnp.dot(z, w1, preferred_element_type=jnp.float32) + b1
    h = h * jnp.where(h >= 0, _GAIN, _NEG_SLOPE)              # lrelu(0.2) * sqrt(2)

    wv = jnp.dot(h, w2h, preferred_element_type=jnp.float32) + b2h
    wv = wv * jnp.where(wv >= 0, _GAIN, _NEG_SLOPE)           # == 0.5 * lrelu(full) (homogeneity)

    # truncation (psi folded upstream) + W-space shift:
    #   wlat = 0.5*lrelu(...) + 0.5*w_avg + shift
    wlat = wv + wavg_h + shift_ref[...]                       # [bm, W_DIM]

    # ---- constant-folded synthetic synthesis, toRGB channel 0 only ----
    out_ref[...] = (jnp.dot(wlat, syn_w_ref[...], preferred_element_type=jnp.float32)
                    + syn_b_ref[...])                         # [bm, HW]


# ------------------------- wrapper -------------------------
def run_generator(z, shift, params):
    Bk = z.shape[0]
    # sublane-aligned batch tile; 128 rows once the request stream is large
    bm = 128 if Bk >= 128 else _round_up(max(Bk, 1), 8)
    Bp = _round_up(Bk, bm)
    if Bp != Bk:
        pad = Bp - Bk
        z = jnp.pad(z, ((0, pad), (0, 0)))
        shift = jnp.pad(shift, ((0, pad), (0, 0)))

    grid = (Bp // bm,)

    flops = 2 * Bp * (Z_DIM * HID + HID * W_DIM + W_DIM * HW)
    bytes_accessed = 4 * (params["w_stack"].size + params["vec_stack"].size
                          + params["syn_w"].size + params["syn_b"].size
                          + Bp * (Z_DIM + W_DIM + HW))
    cost = pl.CostEstimate(flops=flops, transcendentals=Bp, bytes_accessed=bytes_accessed)

    out = pl.pallas_call(
        generator_kernel,
        out_shape=jax.ShapeDtypeStruct((Bp, HW), jnp.float32),
        grid=grid,
        in_specs=[
            pl.BlockSpec((bm, Z_DIM), lambda i: (i, 0)),            # z (per batch tile)
            pl.BlockSpec((bm, W_DIM), lambda i: (i, 0)),            # shift (per batch tile)
            pl.BlockSpec((Z_DIM + HID, HID), lambda i: (0, 0)),     # w1 | 0.5*w2  (resident)
            pl.BlockSpec((8, W_DIM), lambda i: (0, 0)),             # b1 / 0.5*b2 / 0.5*w_avg
            pl.BlockSpec((W_DIM, HW), lambda i: (0, 0)),            # folded synthesis matrix
            pl.BlockSpec((1, HW), lambda i: (0, 0)),                # folded synthesis bias
        ],
        out_specs=pl.BlockSpec((bm, HW), lambda i: (i, 0)),         # lane-dense [bm, 256] slab
        compiler_params=pltpu.CompilerParams(
            dimension_semantics=("parallel",)),                     # shard batch across v7x TCs
        cost_estimate=cost,
    )(z, shift, params["w_stack"], params["vec_stack"], params["syn_w"], params["syn_b"])
    return out[:Bk]


@jax.jit
def stylegan3_wrapper_forward(z, shift, params):
    """Equivalent of StyleGAN3Wrapper.forward(z, shift, latent_is_w=False), shift_in_w_space=True."""
    flat = run_generator(z, shift, params)                     # [B, HW] (channel 0 of NCHW image)
    return flat.reshape(z.shape[0], 1, H, W)                   # == torch.index_select(out, 1, [0])


# ------------------------- deterministic parameter init -------------------------
def init_raw_params(key):
    ks = jax.random.split(key, 8)
    scale = 0.1
    return {
        "w1":    scale * jax.random.normal(ks[0], (Z_DIM, HID),  jnp.float32),
        "b1":    scale * jax.random.normal(ks[1], (1, HID),      jnp.float32),
        "w2":    scale * jax.random.normal(ks[2], (HID, W_DIM),  jnp.float32),
        "b2":    scale * jax.random.normal(ks[3], (1, W_DIM),    jnp.float32),
        "w_avg": scale * jax.random.normal(ks[4], (1, W_DIM),    jnp.float32),
        "const": scale * jax.random.normal(ks[5], (C0, HW),      jnp.float32),
        "aff_w": scale * jax.random.normal(ks[6], (W_DIM, C0),   jnp.float32),
        "aff_b": jnp.ones((1, C0), jnp.float32),                 # style bias init = 1
        "rgb_w": scale * jax.random.normal(ks[7], (C0, OUT_C),   jnp.float32),
    }


def fold_params(raw):
    """One-time f32 constant folding (run at init, OUTSIDE the jitted forward)."""
    # truncation psi=0.5 folded into the second FC (lrelu positive homogeneity) and w_avg
    w2_half    = 0.5 * raw["w2"]
    b2_half    = 0.5 * raw["b2"]
    w_avg_half = 0.5 * raw["w_avg"]

    # mapping weight slab [Z_DIM + HID, HID] and vector slab [8, W_DIM]
    w_stack = jnp.concatenate([raw["w1"], w2_half], axis=0)
    vec_stack = jnp.zeros((8, W_DIM), jnp.float32)
    vec_stack = vec_stack.at[0:1].set(raw["b1"])
    vec_stack = vec_stack.at[1:2].set(b2_half)
    vec_stack = vec_stack.at[2:3].set(w_avg_half)

    # synthesis folded into one [W_DIM, HW] matrix + [1, HW] bias (channel-0 toRGB only)
    const_scaled = raw["rgb_w"][:, 0:1] * raw["const"]          # [C0, HW]
    syn_w = raw["aff_w"] @ const_scaled                          # [W_DIM, HW]
    syn_b = raw["aff_b"] @ const_scaled                          # [1, HW]

    return {"w_stack": w_stack, "vec_stack": vec_stack,
            "syn_w": syn_w, "syn_b": syn_b}


if __name__ == "__main__":
    key = jax.random.PRNGKey(0)
    k_p, k_z, k_s = jax.random.split(key, 3)
    raw = init_raw_params(k_p)
    params = jax.tree_util.tree_map(jax.block_until_ready, fold_params(raw))

    z     = jax.random.normal(k_z, (B, Z_DIM), jnp.float32)
    shift = 0.05 * jax.random.normal(k_s, (B, W_DIM), jnp.float32)

    out = stylegan3_wrapper_forward(z, shift, params)
    out = jax.block_until_ready(out)

    assert out.shape == (B, 1, H, W), out.shape
    assert out.dtype == jnp.float32
    assert bool(jnp.all(jnp.isfinite(out)))
    print("KERNEL_OK")
</pallas_src>

<mosaic_0001>
module attributes {stable_mosaic.version = 11 : i64} {
  func.func @generator_kernel(%arg0: i32, %arg1: memref<8x64xf32, #tpu.memory_space<vmem>>, %arg2: memref<8x64xf32, #tpu.memory_space<vmem>>, %arg3: memref<128x64xf32, #tpu.memory_space<vmem>>, %arg4: memref<8x64xf32, #tpu.memory_space<vmem>>, %arg5: memref<64x256xf32, #tpu.memory_space<vmem>>, %arg6: memref<1x256xf32, #tpu.memory_space<vmem>>, %arg7: memref<8x256xf32, #tpu.memory_space<vmem>>) attributes {dimension_semantics = [#tpu.dimension_semantics<parallel>], iteration_bounds = array<i64: 1>, scalar_prefetch = 0 : i64, scratch_operands = 0 : i64, tpu.core_type = #tpu.core_type<tc>, window_params = [{transform_indices = @transform_0, window_bounds = array<i64: 8, 64>}, {transform_indices = @transform_1, window_bounds = array<i64: 8, 64>}, {pipeline_mode = #tpu.pipeline_mode<synchronous>, transform_indices = @transform_2, window_bounds = array<i64: 128, 64>}, {pipeline_mode = #tpu.pipeline_mode<synchronous>, transform_indices = @transform_3, window_bounds = array<i64: 8, 64>}, {pipeline_mode = #tpu.pipeline_mode<synchronous>, transform_indices = @transform_4, window_bounds = array<i64: 64, 256>}, {pipeline_mode = #tpu.pipeline_mode<synchronous>, transform_indices = @transform_5, window_bounds = array<i64: 1, 256>}, {transform_indices = @transform_6, window_bounds = array<i64: 8, 256>}]} {
    %c0 = arith.constant 0 : index
    %c0_0 = arith.constant 0 : index
    %0 = vector.load %arg1[%c0, %c0_0] : memref<8x64xf32, #tpu.memory_space<vmem>>, vector<8x64xf32>
    %1 = arith.mulf %0, %0 : vector<8x64xf32>
    %cst = arith.constant dense<0.000000e+00> : vector<8xf32>
    %2 = vector.multi_reduction <add>, %1, %cst [1] : vector<8x64xf32> to vector<8xf32>
    %3 = vector.shape_cast %2 : vector<8xf32> to vector<8x1xf32>
    %cst_1 = arith.constant 6.400000e+01 : f32
    %4 = vector.broadcast %cst_1 : f32 to vector<8x1xf32>
    %5 = arith.divf %3, %4 : vector<8x1xf32>
    %cst_2 = arith.constant 9.99999993E-9 : f32
    %6 = vector.broadcast %cst_2 : f32 to vector<8x1xf32>
    %7 = arith.addf %5, %6 : vector<8x1xf32>
    %8 = math.rsqrt %7 : vector<8x1xf32>
    %9 = vector.broadcast %8 : vector<8x1xf32> to vector<8x64xf32>
    %10 = arith.mulf %0, %9 : vector<8x64xf32>
    %c0_3 = arith.constant 0 : index
    %c0_4 = arith.constant 0 : index
    %11 = vector.load %arg3[%c0_3, %c0_4] : memref<128x64xf32, #tpu.memory_space<vmem>>, vector<64x64xf32>
    %c64 = arith.constant 64 : index
    %c0_5 = arith.constant 0 : index
    %12 = vector.load %arg3[%c64, %c0_5] : memref<128x64xf32, #tpu.memory_space<vmem>>, vector<64x64xf32>
    %c0_6 = arith.constant 0 : index
    %c0_7 = arith.constant 0 : index
    %13 = vector.load %arg4[%c0_6, %c0_7] : memref<8x64xf32, #tpu.memory_space<vmem>>, vector<1x64xf32>
    %c1 = arith.constant 1 : index
    %c0_8 = arith.constant 0 : index
    %14 = vector.load %arg4[%c1, %c0_8] : memref<8x64xf32, #tpu.memory_space<vmem>>, vector<1x64xf32>
    %c2 = arith.constant 2 : index
    %c0_9 = arith.constant 0 : index
    %15 = vector.load %arg4[%c2, %c0_9] : memref<8x64xf32, #tpu.memory_space<vmem>>, vector<1x64xf32>
    %cst_10 = arith.constant dense<0.000000e+00> : vector<8x64xf32>
    %16 = tpu.matmul %10, %11, %cst_10 {dimension_numbers = #tpu.dot_dimension_numbers<[1], [0], [0], [1], [0, 0, 1, 1], [], []>} : vector<8x64xf32>, vector<64x64xf32>, vector<8x64xf32> -> vector<8x64xf32>
    %17 = vector.broadcast %13 : vector<1x64xf32> to vector<8x64xf32>
    %18 = arith.addf %16, %17 : vector<8x64xf32>
    %cst_11 = arith.constant 0.000000e+00 : f32
    %19 = vector.broadcast %cst_11 : f32 to vector<8x64xf32>
    %20 = arith.cmpf oge, %18, %19 : vector<8x64xf32>
    %cst_12 = arith.constant 1.41421354 : f32
    %cst_13 = arith.constant 0.282842726 : f32
    %21 = vector.broadcast %cst_12 : f32 to vector<8x64xf32>
    %22 = vector.broadcast %cst_13 : f32 to vector<8x64xf32>
    %23 = arith.select %20, %21, %22 : vector<8x64xi1>, vector<8x64xf32>
    %24 = arith.mulf %18, %23 : vector<8x64xf32>
    %cst_14 = arith.constant dense<0.000000e+00> : vector<8x64xf32>
    %25 = tpu.matmul %24, %12, %cst_14 {dimension_numbers = #tpu.dot_dimension_numbers<[1], [0], [0], [1], [0, 0, 1, 1], [], []>} : vector<8x64xf32>, vector<64x64xf32>, vector<8x64xf32> -> vector<8x64xf32>
    %26 = vector.broadcast %14 : vector<1x64xf32> to vector<8x64xf32>
    %27 = arith.addf %25, %26 : vector<8x64xf32>
    %cst_15 = arith.constant 0.000000e+00 : f32
    %28 = vector.broadcast %cst_15 : f32 to vector<8x64xf32>
    %29 = arith.cmpf oge, %27, %28 : vector<8x64xf32>
    %cst_16 = arith.constant 1.41421354 : f32
    %cst_17 = arith.constant 0.282842726 : f32
    %30 = vector.broadcast %cst_16 : f32 to vector<8x64xf32>
    %31 = vector.broadcast %cst_17 : f32 to vector<8x64xf32>
    %32 = arith.select %29, %30, %31 : vector<8x64xi1>, vector<8x64xf32>
    %33 = arith.mulf %27, %32 : vector<8x64xf32>
    %34 = vector.broadcast %15 : vector<1x64xf32> to vector<8x64xf32>
    %35 = arith.addf %33, %34 : vector<8x64xf32>
    %c0_18 = arith.constant 0 : index
    %c0_19 = arith.constant 0 : index
    %36 = vector.load %arg2[%c0_18, %c0_19] : memref<8x64xf32, #tpu.memory_space<vmem>>, vector<8x64xf32>
    %37 = arith.addf %35, %36 : vector<8x64xf32>
    %c0_20 = arith.constant 0 : index
    %c0_21 = arith.constant 0 : index
    %38 = vector.load %arg5[%c0_20, %c0_21] : memref<64x256xf32, #tpu.memory_space<vmem>>, vector<64x256xf32>
    %cst_22 = arith.constant dense<0.000000e+00> : vector<8x256xf32>
    %39 = tpu.matmul %37, %38, %cst_22 {dimension_numbers = #tpu.dot_dimension_numbers<[1], [0], [0], [1], [0, 0, 1, 1], [], []>} : vector<8x64xf32>, vector<64x256xf32>, vector<8x256xf32> -> vector<8x256xf32>
    %c0_23 = arith.constant 0 : index
    %c0_24 = arith.constant 0 : index
    %40 = vector.load %arg6[%c0_23, %c0_24] : memref<1x256xf32, #tpu.memory_space<vmem>>, vector<1x256xf32>
    %41 = vector.broadcast %40 : vector<1x256xf32> to vector<8x256xf32>
    %42 = arith.addf %39, %41 : vector<8x256xf32>
    %c0_25 = arith.constant 0 : index
    %c0_26 = arith.constant 0 : index
    %43 = vector.load %arg7[%c0_25, %c0_26] : memref<8x256xf32, #tpu.memory_space<vmem>>, vector<8x256xf32>
    tpu.vector_store %arg7[%c0_25, %c0_26], %42 {strides = array<i32>} : memref<8x256xf32, #tpu.memory_space<vmem>>, vector<8x256xf32>,
    return
  }
  func.func @transform_0(%arg0: i32) -> (i32, i32) {
    %c0_i32 = arith.constant 0 : i32
    %c0_i32_0 = arith.constant 0 : i32
    return %arg0, %c0_i32 : i32, i32
  }
  func.func @transform_1(%arg0: i32) -> (i32, i32) {
    %c0_i32 = arith.constant 0 : i32
    %c0_i32_0 = arith.constant 0 : i32
    return %arg0, %c0_i32 : i32, i32
  }
  func.func @transform_2(%arg0: i32) -> (i32, i32) {
    %c0_i32 = arith.constant 0 : i32
    %c0_i32_0 = arith.constant 0 : i32
    %c0_i32_1 = arith.constant 0 : i32
    return %c0_i32, %c0_i32_0 : i32, i32
  }
  func.func @transform_3(%arg0: i32) -> (i32, i32) {
    %c0_i32 = arith.constant 0 : i32
    %c0_i32_0 = arith.constant 0 : i32
    %c0_i32_1 = arith.constant 0 : i32
    return %c0_i32, %c0_i32_0 : i32, i32
  }
  func.func @transform_4(%arg0: i32) -> (i32, i32) {
    %c0_i32 = arith.constant 0 : i32
    %c0_i32_0 = arith.constant 0 : i32
    %c0_i32_1 = arith.constant 0 : i32
    return %c0_i32, %c0_i32_0 : i32, i32
  }
  func.func @transform_5(%arg0: i32) -> (i32, i32) {
    %c0_i32 = arith.constant 0 : i32
    %c0_i32_0 = arith.constant 0 : i32
    %c0_i32_1 = arith.constant 0 : i32
    return %c0_i32, %c0_i32_0 : i32, i32
  }
  func.func @transform_6(%arg0: i32) -> (i32, i32) {
    %c0_i32 = arith.constant 0 : i32
    %c0_i32_0 = arith.constant 0 : i32
    return %arg0, %c0_i32 : i32, i32
  }
}

</mosaic_0001>

<llo_original>
// kernel: stylegan3_wrapper_forward.1
$region0: #{stylegan3_wrapper_forward.1}
  #allocation0 [shape = 'u32[]', space=smem, size = 0x4, offset = 0x4, fixed_abs, tag = 'smem constant byte address 0x4 - core index']
  #allocation1 [shape = 'u32[144,128]{1,0:T(1,128)}', space=vmem, size = 0x12000, scoped, tag = 'internal scratch']
  %s0 = inlined_call_operand.vmem [shape: f32[8,64], index: 0, kind: input, shape index: {}]
  %s1 = inlined_call_operand.vmem [shape: f32[8,64], index: 1, kind: input, shape index: {}]
  %s2 = inlined_call_operand.vmem [shape: f32[128,64], index: 2, kind: input, shape index: {}]
  %s3 = inlined_call_operand.vmem [shape: f32[8,64], index: 3, kind: input, shape index: {}]
  %s4 = inlined_call_operand.vmem [shape: f32[64,256], index: 4, kind: input, shape index: {}]
  %s5 = inlined_call_operand.vmem [shape: f32[1,256], index: 5, kind: input, shape index: {}]
  %s6 = inlined_call_operand.vmem [shape: f32[8,256], index: 6, kind: output, shape index: {}]
  %s7 = sld [smem:[#allocation0]]
  $region34: #{stylegan3_wrapper_forward.1} parent=0
    _
  %s9 = ssub.s32 1, %s7
  %s10 = scalar_select 0, %s9, %s7
  // Predicated region
  $region2: #{stylegan3_wrapper_forward.1} parent=0 // pred_check
    _
  $region3: #{stylegan3_wrapper_forward.1} parent=0 // pred_check_branch
    %12 = sbr.rel (0) target = $region5
  $region4: #{stylegan3_wrapper_forward.1} parent=0 // pred_region
    _
  $region5: #{stylegan3_wrapper_forward.1} parent=0 // pred_fallthru
    _
  // Predicated region
  $region6: #{stylegan3_wrapper_forward.1} parent=0 // pred_check
    _
  $region7: #{stylegan3_wrapper_forward.1} parent=0 // pred_check_branch
    %14 = sbr.rel (0) target = $region9
  $region8: #{stylegan3_wrapper_forward.1} parent=0 // pred_region
    _
  $region9: #{stylegan3_wrapper_forward.1} parent=0 // pred_fallthru
    _
  // Predicated region
  $region10: #{stylegan3_wrapper_forward.1} parent=0 // pred_check
    _
  $region11: #{stylegan3_wrapper_forward.1} parent=0 // pred_check_branch
    %16 = sbr.rel (0) target = $region13
  $region12: #{stylegan3_wrapper_forward.1} parent=0 // pred_region
    _
  $region13: #{stylegan3_wrapper_forward.1} parent=0 // pred_fallthru
    _
  // Predicated region
  $region14: #{stylegan3_wrapper_forward.1} parent=0 // pred_check
    _
  $region15: #{stylegan3_wrapper_forward.1} parent=0 // pred_check_branch
    %18 = sbr.rel (0) target = $region17
  $region16: #{stylegan3_wrapper_forward.1} parent=0 // pred_region
    _
  $region17: #{stylegan3_wrapper_forward.1} parent=0 // pred_fallthru
    _
  // Predicated region
  $region18: #{stylegan3_wrapper_forward.1} parent=0 // pred_check
    _
  $region19: #{stylegan3_wrapper_forward.1} parent=0 // pred_check_branch
    %20 = sbr.rel (0) target = $region21
  $region20: #{stylegan3_wrapper_forward.1} parent=0 // pred_region
    _
  $region21: #{stylegan3_wrapper_forward.1} parent=0 // pred_fallthru
    _
  // Predicated region
  $region22: #{stylegan3_wrapper_forward.1} parent=0 // pred_check
    _
  $region23: #{stylegan3_wrapper_forward.1} parent=0 // pred_check_branch
    %22 = sbr.rel (0) target = $region25
  $region24: #{stylegan3_wrapper_forward.1} parent=0 // pred_region
    _
  $region25: #{stylegan3_wrapper_forward.1} parent=0 // pred_fallthru
    _
  %v23 = vld [vmem:[%s0] sm:$0xff]
  %v24 = vmul.f32 %v23, %v23
  %vm25 = vcmask 523264
  %v26 = vsel %vm25, %v24, 0.0
  %27 = vadd.xlane.f32.xlu0 %v26
  %v28 = vpop.xlane.xlu0 %27
  %v29 = vrcp.pop 64.0
  %v30 = vmul.f32 %v28, %v29
  %v31 = vadd.f32 %v30, 1e-08
  %v32 = vrsqrt.pop %v31
  %v33 = vmul.f32 %v23, %v32
  %v34 = vld [vmem:[%s2] sm:$0xff]
  %v35 = vld [vmem:[%s2 + $0x8] sm:$0xff]
  %v36 = vld [vmem:[%s2 + $0x10] sm:$0xff]
  %v37 = vld [vmem:[%s2 + $0x18] sm:$0xff]
  %v38 = vld [vmem:[%s2 + $0x20] sm:$0xff]
  %v39 = vld [vmem:[%s2 + $0x28] sm:$0xff]
  %v40 = vld [vmem:[%s2 + $0x30] sm:$0xff]
  %v41 = vld [vmem:[%s2 + $0x38] sm:$0xff]
  %v42 = vld [vmem:[%s2 + $0x40] sm:$0xff]
  %v43 = vld [vmem:[%s2 + $0x48] sm:$0xff]
  %v44 = vld [vmem:[%s2 + $0x50] sm:$0xff]
  %v45 = vld [vmem:[%s2 + $0x58] sm:$0xff]
  %v46 = vld [vmem:[%s2 + $0x60] sm:$0xff]
  %v47 = vld [vmem:[%s2 + $0x68] sm:$0xff]
  %v48 = vld [vmem:[%s2 + $0x70] sm:$0xff]
  %v49 = vld [vmem:[%s2 + $0x78] sm:$0xff]
  %v50 = vld [vmem:[%s3] sm:$0x1]
  %v51 = vld [vmem:[%s3 + $0x1] sm:$0x1]
  %v52 = vld [vmem:[%s3 + $0x2] sm:$0x1]
  %v53 = vlaneseq
  %v54 = vshrl.u32 %v53, 7
  %v55 = vsub.s32 0, %v54
  %v56 = vrot.slane %v50, %v55
  %v58 = vsel %vm25, %v33, 0
  %60 = vmatprep.subr.mxu0 0.0
  %61 = vmatpush1.msra.mxu0 0.0
  %62 = vmatprep.subr.mxu0 0.0
  %63 = vmatpush1.msra.mxu0 0.0
  %64 = vmatprep.subr.mxu0 0.0
  %65 = vmatpush1.msra.mxu0 0.0
  %66 = vmatprep.subr.mxu0 0.0
  %67 = vmatpush1.msra.mxu0 0.0
  %68 = vmatprep.subr.mxu0 0.0
  %69 = vmatpush1.msra.mxu0 0.0
  %70 = vmatprep.subr.mxu0 0.0
  %71 = vmatpush1.msra.mxu0 0.0
  %72 = vmatprep.subr.mxu0 0.0
  %73 = vmatpush1.msra.mxu0 0.0
  %74 = vmatprep.subr.mxu0 0.0
  %75 = vmatpush1.msra.mxu0 0.0
  %76 = vmatprep.subr.mxu0 0.0
  %77 = vmatpush1.msra.mxu0 %v41
  %78 = vmatprep.subr.mxu0 0.0
  %79 = vmatpush1.msra.mxu0 %v40
  %80 = vmatprep.subr.mxu0 0.0
  %81 = vmatpush1.msra.mxu0 %v39
  %82 = vmatprep.subr.mxu0 0.0
  %83 = vmatpush1.msra.mxu0 %v38
  %84 = vmatprep.subr.mxu0 0.0
  %85 = vmatpush1.msra.mxu0 %v37
  %86 = vmatprep.subr.mxu0 0.0
  %87 = vmatpush1.msra.mxu0 %v36
  %88 = vmatprep.subr.mxu0 0.0
  %89 = vmatpush1.msra.mxu0 %v35
  %90 = vmatprep.subr.mxu0 0.0
  %91 = vmatpush1.msra.mxu0 %v34
  %92 = vmatprep.subr.mxu0 0.0
  %93 = vmatpush2.msra.mxu0 0.0
  %94 = vmatprep.subr.mxu0 0.0
  %95 = vmatpush2.msra.mxu0 0.0
  %96 = vmatprep.subr.mxu0 0.0
  %97 = vmatpush2.msra.mxu0 0.0
  %98 = vmatprep.subr.mxu0 0.0
  %99 = vmatpush2.msra.mxu0 0.0
  %100 = vmatprep.subr.mxu0 0.0
  %101 = vmatpush2.msra.mxu0 0.0
  %102 = vmatprep.subr.mxu0 0.0
  %103 = vmatpush2.msra.mxu0 0.0
  %104 = vmatprep.subr.mxu0 0.0
  %105 = vmatpush2.msra.mxu0 0.0
  %106 = vmatprep.subr.mxu0 0.0
  %107 = vmatpush2.msra.mxu0 0.0
  %108 = vmatprep.subr.mxu0 0.0
  %109 = vmatpush2.msra.mxu0 0.0
  %110 = vmatprep.subr.mxu0 0.0
  %111 = vmatpush2.msra.mxu0 0.0
  %112 = vmatprep.subr.mxu0 0.0
  %113 = vmatpush2.msra.mxu0 0.0
  %114 = vmatprep.subr.mxu0 0.0
  %115 = vmatpush2.msra.mxu0 0.0
  %116 = vmatprep.subr.mxu0 0.0
  %117 = vmatpush2.msra.mxu0 0.0
  %118 = vmatprep.subr.mxu0 0.0
  %119 = vmatpush2.msra.mxu0 0.0
  %120 = vmatprep.subr.mxu0 0.0
  %121 = vmatpush2.msra.mxu0 0.0
  %122 = vmatprep.subr.mxu0 0.0
  %123 = vmatpush2.msra.mxu0 0.0
  %124 = vmatprep.mubr.f32.mxu0 0.0
  %125 = vmatmul.mubr.f32.gmra.mxu0 %v58
  %v126 = vpop.f32.mrf.mxu0
  %v127 = vadd.f32 %v56, %v126
  %v128 = vpop.f32.mrf.mxu0
  %129 = vdwg.mxu0
  %vm130 = vcmp.ge.f32.partialorder %v127, 0.0
  %v131 = vsel %vm130, 1.4142135, 0.28284273
  %v132 = vmul.f32 %v127, %v131
  %v133 = vlaneseq
  %v134 = vshrl.u32 %v133, 7
  %v135 = vsub.s32 0, %v134
  %v136 = vrot.slane %v51, %v135
  %v138 = vsel %vm25, %v132, 0
  %140 = vmatprep.subr.mxu0 0.0
  %141 = vmatpush1.msra.mxu0 0.0
  %142 = vmatprep.subr.mxu0 0.0
  %143 = vmatpush1.msra.mxu0 0.0
  %144 = vmatprep.subr.mxu0 0.0
  %145 = vmatpush1.msra.mxu0 0.0
  %146 = vmatprep.subr.mxu0 0.0
  %147 = vmatpush1.msra.mxu0 0.0
  %148 = vmatprep.subr.mxu0 0.0
  %149 = vmatpush1.msra.mxu0 0.0
  %150 = vmatprep.subr.mxu0 0.0
  %151 = vmatpush1.msra.mxu0 0.0
  %152 = vmatprep.subr.mxu0 0.0
  %153 = vmatpush1.msra.mxu0 0.0
  %154 = vmatprep.subr.mxu0 0.0
  %155 = vmatpush1.msra.mxu0 0.0
  %156 = vmatprep.subr.mxu0 0.0
  %157 = vmatpush1.msra.mxu0 %v49
  %158 = vmatprep.subr.mxu0 0.0
  %159 = vmatpush1.msra.mxu0 %v48
  %160 = vmatprep.subr.mxu0 0.0
  %161 = vmatpush1.msra.mxu0 %v47
  %162 = vmatprep.subr.mxu0 0.0
  %163 = vmatpush1.msra.mxu0 %v46
  %164 = vmatprep.subr.mxu0 0.0
  %165 = vmatpush1.msra.mxu0 %v45
  %166 = vmatprep.subr.mxu0 0.0
  %167 = vmatpush1.msra.mxu0 %v44
  %168 = vmatprep.subr.mxu0 0.0
  %169 = vmatpush1.msra.mxu0 %v43
  %170 = vmatprep.subr.mxu0 0.0
  %171 = vmatpush1.msra.mxu0 %v42
  %172 = vmatprep.subr.mxu0 0.0
  %173 = vmatpush2.msra.mxu0 0.0
  %174 = vmatprep.subr.mxu0 0.0
  %175 = vmatpush2.msra.mxu0 0.0
  %176 = vmatprep.subr.mxu0 0.0
  %177 = vmatpush2.msra.mxu0 0.0
  %178 = vmatprep.subr.mxu0 0.0
  %179 = vmatpush2.msra.mxu0 0.0
  %180 = vmatprep.subr.mxu0 0.0
  %181 = vmatpush2.msra.mxu0 0.0
  %182 = vmatprep.subr.mxu0 0.0
  %183 = vmatpush2.msra.mxu0 0.0
  %184 = vmatprep.subr.mxu0 0.0
  %185 = vmatpush2.msra.mxu0 0.0
  %186 = vmatprep.subr.mxu0 0.0
  %187 = vmatpush2.msra.mxu0 0.0
  %188 = vmatprep.subr.mxu0 0.0
  %189 = vmatpush2.msra.mxu0 0.0
  %190 = vmatprep.subr.mxu0 0.0
  %191 = vmatpush2.msra.mxu0 0.0
  %192 = vmatprep.subr.mxu0 0.0
  %193 = vmatpush2.msra.mxu0 0.0
  %194 = vmatprep.subr.mxu0 0.0
  %195 = vmatpush2.msra.mxu0 0.0
  %196 = vmatprep.subr.mxu0 0.0
  %197 = vmatpush2.msra.mxu0 0.0
  %198 = vmatprep.subr.mxu0 0.0
  %199 = vmatpush2.msra.mxu0 0.0
  %200 = vmatprep.subr.mxu0 0.0
  %201 = vmatpush2.msra.mxu0 0.0
  %202 = vmatprep.subr.mxu0 0.0
  %203 = vmatpush2.msra.mxu0 0.0
  %204 = vmatprep.mubr.f32.mxu0 0.0
  %205 = vmatmul.mubr.f32.gmra.mxu0 %v138
  %v206 = vpop.f32.mrf.mxu0
  %v207 = vadd.f32 %v136, %v206
  %v208 = vpop.f32.mrf.mxu0
  %209 = vdwg.mxu0
  %vm210 = vcmp.ge.f32.partialorder %v207, 0.0
  %v211 = vsel %vm210, 1.4142135, 0.28284273
  %v212 = vmul.f32 %v207, %v211
  %v213 = vlaneseq
  %v214 = vshrl.u32 %v213, 7
  %v215 = vsub.s32 0, %v214
  %v216 = vrot.slane %v52, %v215
  %v217 = vadd.f32 %v212, %v216
  %v218 = vld [vmem:[%s1] sm:$0xff]
  %v219 = vadd.f32 %v217, %v218
  %v220 = vld [vmem:[%s4] sm:$0xff]
  %v221 = vld [vmem:[%s4 + $0x8] sm:$0xff]
  %v222 = vld [vmem:[%s4 + $0x10] sm:$0xff]
  %v223 = vld [vmem:[%s4 + $0x18] sm:$0xff]
  %v224 = vld [vmem:[%s4 + $0x20] sm:$0xff]
  %v225 = vld [vmem:[%s4 + $0x28] sm:$0xff]
  %v226 = vld [vmem:[%s4 + $0x30] sm:$0xff]
  %v227 = vld [vmem:[%s4 + $0x38] sm:$0xff]
  %v228 = vld [vmem:[%s4 + $0x40] sm:$0xff]
  %v229 = vld [vmem:[%s4 + $0x48] sm:$0xff]
  %v230 = vld [vmem:[%s4 + $0x50] sm:$0xff]
  %v231 = vld [vmem:[%s4 + $0x58] sm:$0xff]
  %v232 = vld [vmem:[%s4 + $0x60] sm:$0xff]
  %v233 = vld [vmem:[%s4 + $0x68] sm:$0xff]
  %v234 = vld [vmem:[%s4 + $0x70] sm:$0xff]
  %v235 = vld [vmem:[%s4 + $0x78] sm:$0xff]
  %v236 = vld [vmem:[%s5] sm:$0x3]
  %v238 = vlaneseq
  %v239 = vshrl.u32 %v238, 7
  %v240 = vsub.s32 0, %v239
  %v241 = vrot.slane %v236, %v240
  %v242 = vlaneseq
  %v243 = vshrl.u32 %v242, 7
  %v244 = vsub.s32 1, %v243
  %v245 = vrot.slane %v236, %v244
  %v249 = vsel %vm25, %v219, 0
  %251 = vmatprep.subr.mxu0 0.0
  %252 = vmatpush1.msra.mxu0 0.0
  %253 = vmatprep.subr.mxu0 0.0
  %254 = vmatpush1.msra.mxu0 0.0
  %255 = vmatprep.subr.mxu0 0.0
  %256 = vmatpush1.msra.mxu0 0.0
  %257 = vmatprep.subr.mxu0 0.0
  %258 = vmatpush1.msra.mxu0 0.0
  %259 = vmatprep.subr.mxu0 0.0
  %260 = vmatpush1.msra.mxu0 0.0
  %261 = vmatprep.subr.mxu0 0.0
  %262 = vmatpush1.msra.mxu0 0.0
  %263 = vmatprep.subr.mxu0 0.0
  %264 = vmatpush1.msra.mxu0 0.0
  %265 = vmatprep.subr.mxu0 0.0
  %266 = vmatpush1.msra.mxu0 0.0
  %267 = vmatprep.subr.mxu0 %v235
  %268 = vmatpush1.msra.mxu0 %v234
  %269 = vmatprep.subr.mxu0 %v233
  %270 = vmatpush1.msra.mxu0 %v232
  %271 = vmatprep.subr.mxu0 %v231
  %272 = vmatpush1.msra.mxu0 %v230
  %273 = vmatprep.subr.mxu0 %v229
  %274 = vmatpush1.msra.mxu0 %v228
  %275 = vmatprep.subr.mxu0 %v227
  %276 = vmatpush1.msra.mxu0 %v226
  %277 = vmatprep.subr.mxu0 %v225
  %278 = vmatpush1.msra.mxu0 %v224
  %279 = vmatprep.subr.mxu0 %v223
  %280 = vmatpush1.msra.mxu0 %v222
  %281 = vmatprep.subr.mxu0 %v221
  %282 = vmatpush1.msra.mxu0 %v220
  %283 = vmatprep.subr.mxu0 0.0
  %284 = vmatpush2.msra.mxu0 0.0
  %285 = vmatprep.subr.mxu0 0.0
  %286 = vmatpush2.msra.mxu0 0.0
  %287 = vmatprep.subr.mxu0 0.0
  %288 = vmatpush2.msra.mxu0 0.0
  %289 = vmatprep.subr.mxu0 0.0
  %290 = vmatpush2.msra.mxu0 0.0
  %291 = vmatprep.subr.mxu0 0.0
  %292 = vmatpush2.msra.mxu0 0.0
  %293 = vmatprep.subr.mxu0 0.0
  %294 = vmatpush2.msra.mxu0 0.0
  %295 = vmatprep.subr.mxu0 0.0
  %296 = vmatpush2.msra.mxu0 0.0
  %297 = vmatprep.subr.mxu0 0.0
  %298 = vmatpush2.msra.mxu0 0.0
  %299 = vmatprep.subr.mxu0 0.0
  %300 = vmatpush2.msra.mxu0 0.0
  %301 = vmatprep.subr.mxu0 0.0
  %302 = vmatpush2.msra.mxu0 0.0
  %303 = vmatprep.subr.mxu0 0.0
  %304 = vmatpush2.msra.mxu0 0.0
  %305 = vmatprep.subr.mxu0 0.0
  %306 = vmatpush2.msra.mxu0 0.0
  %307 = vmatprep.subr.mxu0 0.0
  %308 = vmatpush2.msra.mxu0 0.0
  %309 = vmatprep.subr.mxu0 0.0
  %310 = vmatpush2.msra.mxu0 0.0
  %311 = vmatprep.subr.mxu0 0.0
  %312 = vmatpush2.msra.mxu0 0.0
  %313 = vmatprep.subr.mxu0 0.0
  %314 = vmatpush2.msra.mxu0 0.0
  %315 = vmatprep.mubr.f32.mxu0 0.0
  %316 = vmatmul.mubr.f32.gmra.mxu0 %v249
  %v317 = vpop.f32.mrf.mxu0
  %v318 = vadd.f32 %v241, %v317
  %v319 = vpop.f32.mrf.mxu0
  %v320 = vadd.f32 %v245, %v319
  %321 = vdwg.mxu0
  %322 = vst [vmem:[%s6] sm:$0xff] %v318
  %323 = vst [vmem:[%s6 + $0x8] sm:$0xff] %v320
  // Predicated region
  $region26: #{stylegan3_wrapper_forward.1} parent=0 // pred_check
    _
  $region27: #{stylegan3_wrapper_forward.1} parent=0 // pred_check_branch
    %325 = sbr.rel (0) target = $region29
  $region28: #{stylegan3_wrapper_forward.1} parent=0 // pred_region
    _
  $region29: #{stylegan3_wrapper_forward.1} parent=0 // pred_fallthru
    _
  // Predicated region
  $region30: #{stylegan3_wrapper_forward.1} parent=0 // pred_check
    _
  $region31: #{stylegan3_wrapper_forward.1} parent=0 // pred_check_branch
    %327 = sbr.rel (0) target = $region33
  $region32: #{stylegan3_wrapper_forward.1} parent=0 // pred_region
    _
  $region33: #{stylegan3_wrapper_forward.1} parent=0 // pred_fallthru
    _

</llo_original>
